<compile_context>
chip_gen: v7x
topology: tpu7x:2x2x1
jax: 0.10.0
libtpu: 0.0.40
codegen_flags: <defaults>
</compile_context>

<pallas_src>
import jax
import jax.numpy as jnp
from jax.experimental import pallas as pl
from jax.experimental.pallas import tpu as pltpu

HID_SIZE = 128
NEG_SLOPE = 0.01   # nn.LeakyReLU default negative_slope
LANE = 128         # TPU lane width
SUBLANE = 16       # bf16 sublane packing


def _leaky_relu(v):
    # f32 elementwise on the VPU (no bf16 VPU path on v5e).
    return jnp.where(v > 0, v, NEG_SLOPE * v)


def mlp_kernel(x_ref, w1_ref, b1_ref, w2_ref, b2_ref, o_ref):
    # Two MXU matmuls (bf16 in, f32 accumulate) + bias + LeakyReLU, all in VMEM.
    h = jnp.dot(x_ref[...], w1_ref[...],
                preferred_element_type=jnp.float32) + b1_ref[...]
    h = _leaky_relu(h)
    y = jnp.dot(h.astype(jnp.bfloat16), w2_ref[...],
                preferred_element_type=jnp.float32) + b2_ref[...]
    o_ref[...] = _leaky_relu(y).astype(o_ref.dtype)


def _round_up(n, m):
    return ((n + m - 1) // m) * m


def homework_net_forward(x, w1, b1, w2, b2, *, batch_tile=512):
    """x: [B, d_in] f32; w1: [d_in, d_hid]; b1: [1, d_hid]; w2: [d_hid, d_out]; b2: [1, d_out]."""
    B, d_in = x.shape
    d_hid = w1.shape[1]
    d_out = w2.shape[1]

    # --- lane-dense output: pad d_out to a multiple of 128 with zero cols ---
    d_out_p = _round_up(d_out, LANE)
    if d_out_p != d_out:
        w2 = jnp.pad(w2, ((0, 0), (0, d_out_p - d_out)))
        b2 = jnp.pad(b2, ((0, 0), (0, d_out_p - d_out)))

    # --- batch tiling: multiple of 16 (bf16 sublanes); pad batch if needed ---
    bt = min(batch_tile, _round_up(B, SUBLANE))
    bt = max(SUBLANE, _round_up(bt, SUBLANE))
    B_pad = _round_up(B, bt)
    if B_pad != B:
        x = jnp.pad(x, ((0, B_pad - B), (0, 0)))
    grid = (B_pad // bt,)

    # --- bf16 MXU inputs (halves HBM traffic); biases stay f32 ---
    x_bf = x.astype(jnp.bfloat16)
    w1_bf = w1.astype(jnp.bfloat16)
    w2_bf = w2.astype(jnp.bfloat16)
    b1_f = b1.astype(jnp.float32)
    b2_f = b2.astype(jnp.float32)

    cost = pl.CostEstimate(
        flops=2 * B_pad * (d_in * d_hid + d_hid * d_out_p),
        transcendentals=0,
        bytes_accessed=(x_bf.size * 2 + w1_bf.size * 2 + w2_bf.size * 2
                        + b1_f.size * 4 + b2_f.size * 4
                        + B_pad * d_out_p * 4),
    )

    out = pl.pallas_call(
        mlp_kernel,
        out_shape=jax.ShapeDtypeStruct((B_pad, d_out_p), jnp.float32),
        grid_spec=pltpu.PrefetchScalarGridSpec(
            num_scalar_prefetch=0,
            grid=grid,
            in_specs=[
                pl.BlockSpec((bt, d_in), lambda i: (i, 0)),       # x tile
                pl.BlockSpec((d_in, d_hid), lambda i: (0, 0)),    # W1 (resident)
                pl.BlockSpec((1, d_hid), lambda i: (0, 0)),       # b1 (resident)
                pl.BlockSpec((d_hid, d_out_p), lambda i: (0, 0)), # W2 (resident)
                pl.BlockSpec((1, d_out_p), lambda i: (0, 0)),     # b2 (resident)
            ],
            out_specs=pl.BlockSpec((bt, d_out_p), lambda i: (i, 0)),
        ),
        compiler_params=pltpu.CompilerParams(
            dimension_semantics=("parallel",)),
        cost_estimate=cost,
    )(x_bf, w1_bf, b1_f, w2_bf, b2_f)

    # strip batch / feature padding
    return out[:B, :d_out]


def reference_forward(x, w1, b1, w2, b2):
    # Same dtype policy as the kernel: bf16 operands, f32 accumulate/activation.
    xb = x.astype(jnp.bfloat16)
    w1b = w1.astype(jnp.bfloat16)
    w2b = w2.astype(jnp.bfloat16)
    h = jnp.dot(xb, w1b, preferred_element_type=jnp.float32) + b1
    h = jnp.where(h > 0, h, NEG_SLOPE * h)
    y = jnp.dot(h.astype(jnp.bfloat16), w2b,
                preferred_element_type=jnp.float32) + b2
    return jnp.where(y > 0, y, NEG_SLOPE * y)


if __name__ == "__main__":
    # Small shapes consistent with the module: input_size=32, output_size=16.
    batch, input_size, output_size = 8, 32, 16

    key = jax.random.PRNGKey(0)
    kx, k1, kb1, k2, kb2 = jax.random.split(key, 5)

    x = jax.random.normal(kx, (batch, input_size), dtype=jnp.float32)
    # Deterministic synthetic parameters (uniform, roughly Linear-init scale)
    w1 = jax.random.uniform(k1, (input_size, HID_SIZE), jnp.float32,
                            minval=-1.0, maxval=1.0) / jnp.sqrt(input_size)
    b1 = jax.random.uniform(kb1, (1, HID_SIZE), jnp.float32,
                            minval=-1.0, maxval=1.0) / jnp.sqrt(input_size)
    w2 = jax.random.uniform(k2, (HID_SIZE, output_size), jnp.float32,
                            minval=-1.0, maxval=1.0) / jnp.sqrt(HID_SIZE)
    b2 = jax.random.uniform(kb2, (1, output_size), jnp.float32,
                            minval=-1.0, maxval=1.0) / jnp.sqrt(HID_SIZE)

    out = homework_net_forward(x, w1, b1, w2, b2)
    out = jax.block_until_ready(out)

    ref = reference_forward(x, w1, b1, w2, b2)
    assert out.shape == (batch, output_size)
    # bf16 MXU inputs -> loosened tolerance vs the (same-dtype-policy) reference
    assert jnp.allclose(out, ref, atol=2e-2, rtol=2e-2)

    # TODO(synk): training branch (nn.CrossEntropyLoss when y is given) not implemented;
    # this kernel covers the inference forward pass only.
    print("KERNEL_OK")
</pallas_src>

<mosaic_0001>
module attributes {stable_mosaic.version = 11 : i64} {
  func.func @mlp_kernel(%arg0: i32, %arg1: memref<16x32xbf16, #tpu.memory_space<vmem>>, %arg2: memref<32x128xbf16, #tpu.memory_space<vmem>>, %arg3: memref<1x128xf32, #tpu.memory_space<vmem>>, %arg4: memref<128x128xbf16, #tpu.memory_space<vmem>>, %arg5: memref<1x128xf32, #tpu.memory_space<vmem>>, %arg6: memref<16x128xf32, #tpu.memory_space<vmem>>) attributes {dimension_semantics = [#tpu.dimension_semantics<parallel>], iteration_bounds = array<i64: 1>, scalar_prefetch = 0 : i64, scratch_operands = 0 : i64, tpu.core_type = #tpu.core_type<tc>, window_params = [{transform_indices = @transform_0, window_bounds = array<i64: 16, 32>}, {pipeline_mode = #tpu.pipeline_mode<synchronous>, transform_indices = @transform_1, window_bounds = array<i64: 32, 128>}, {pipeline_mode = #tpu.pipeline_mode<synchronous>, transform_indices = @transform_2, window_bounds = array<i64: 1, 128>}, {pipeline_mode = #tpu.pipeline_mode<synchronous>, transform_indices = @transform_3, window_bounds = array<i64: 128, 128>}, {pipeline_mode = #tpu.pipeline_mode<synchronous>, transform_indices = @transform_4, window_bounds = array<i64: 1, 128>}, {transform_indices = @transform_5, window_bounds = array<i64: 16, 128>}]} {
    %c0 = arith.constant 0 : index
    %c0_0 = arith.constant 0 : index
    %0 = vector.load %arg1[%c0, %c0_0] : memref<16x32xbf16, #tpu.memory_space<vmem>>, vector<16x32xbf16>
    %c0_1 = arith.constant 0 : index
    %c0_2 = arith.constant 0 : index
    %1 = vector.load %arg2[%c0_1, %c0_2] : memref<32x128xbf16, #tpu.memory_space<vmem>>, vector<32x128xbf16>
    %cst = arith.constant dense<0.000000e+00> : vector<16x128xf32>
    %2 = tpu.matmul %0, %1, %cst {dimension_numbers = #tpu.dot_dimension_numbers<[1], [0], [0], [1], [0, 0, 1, 1], [], []>} : vector<16x32xbf16>, vector<32x128xbf16>, vector<16x128xf32> -> vector<16x128xf32>
    %c0_3 = arith.constant 0 : index
    %c0_4 = arith.constant 0 : index
    %3 = vector.load %arg3[%c0_3, %c0_4] : memref<1x128xf32, #tpu.memory_space<vmem>>, vector<1x128xf32>
    %4 = vector.broadcast %3 : vector<1x128xf32> to vector<16x128xf32>
    %5 = arith.addf %2, %4 : vector<16x128xf32>
    %cst_5 = arith.constant 0.000000e+00 : f32
    %6 = vector.broadcast %cst_5 : f32 to vector<16x128xf32>
    %7 = arith.cmpf ogt, %5, %6 : vector<16x128xf32>
    %cst_6 = arith.constant 0.00999999977 : f32
    %8 = vector.broadcast %cst_6 : f32 to vector<16x128xf32>
    %9 = arith.mulf %8, %5 : vector<16x128xf32>
    %10 = arith.select %7, %5, %9 : vector<16x128xi1>, vector<16x128xf32>
    %11 = arith.truncf %10 : vector<16x128xf32> to vector<16x128xbf16>
    %c0_7 = arith.constant 0 : index
    %c0_8 = arith.constant 0 : index
    %12 = vector.load %arg4[%c0_7, %c0_8] : memref<128x128xbf16, #tpu.memory_space<vmem>>, vector<128x128xbf16>
    %cst_9 = arith.constant dense<0.000000e+00> : vector<16x128xf32>
    %13 = tpu.matmul %11, %12, %cst_9 {dimension_numbers = #tpu.dot_dimension_numbers<[1], [0], [0], [1], [0, 0, 1, 1], [], []>} : vector<16x128xbf16>, vector<128x128xbf16>, vector<16x128xf32> -> vector<16x128xf32>
    %c0_10 = arith.constant 0 : index
    %c0_11 = arith.constant 0 : index
    %14 = vector.load %arg5[%c0_10, %c0_11] : memref<1x128xf32, #tpu.memory_space<vmem>>, vector<1x128xf32>
    %15 = vector.broadcast %14 : vector<1x128xf32> to vector<16x128xf32>
    %16 = arith.addf %13, %15 : vector<16x128xf32>
    %cst_12 = arith.constant 0.000000e+00 : f32
    %17 = vector.broadcast %cst_12 : f32 to vector<16x128xf32>
    %18 = arith.cmpf ogt, %16, %17 : vector<16x128xf32>
    %cst_13 = arith.constant 0.00999999977 : f32
    %19 = vector.broadcast %cst_13 : f32 to vector<16x128xf32>
    %20 = arith.mulf %19, %16 : vector<16x128xf32>
    %21 = arith.select %18, %16, %20 : vector<16x128xi1>, vector<16x128xf32>
    %c0_14 = arith.constant 0 : index
    %c0_15 = arith.constant 0 : index
    %22 = vector.load %arg6[%c0_14, %c0_15] : memref<16x128xf32, #tpu.memory_space<vmem>>, vector<16x128xf32>
    tpu.vector_store %arg6[%c0_14, %c0_15], %21 {strides = array<i32>} : memref<16x128xf32, #tpu.memory_space<vmem>>, vector<16x128xf32>,
    return
  }
  func.func @transform_0(%arg0: i32) -> (i32, i32) {
    %c0_i32 = arith.constant 0 : i32
    %c0_i32_0 = arith.constant 0 : i32
    return %arg0, %c0_i32 : i32, i32
  }
  func.func @transform_1(%arg0: i32) -> (i32, i32) {
    %c0_i32 = arith.constant 0 : i32
    %c0_i32_0 = arith.constant 0 : i32
    %c0_i32_1 = arith.constant 0 : i32
    return %c0_i32, %c0_i32_0 : i32, i32
  }
  func.func @transform_2(%arg0: i32) -> (i32, i32) {
    %c0_i32 = arith.constant 0 : i32
    %c0_i32_0 = arith.constant 0 : i32
    %c0_i32_1 = arith.constant 0 : i32
    return %c0_i32, %c0_i32_0 : i32, i32
  }
  func.func @transform_3(%arg0: i32) -> (i32, i32) {
    %c0_i32 = arith.constant 0 : i32
    %c0_i32_0 = arith.constant 0 : i32
    %c0_i32_1 = arith.constant 0 : i32
    return %c0_i32, %c0_i32_0 : i32, i32
  }
  func.func @transform_4(%arg0: i32) -> (i32, i32) {
    %c0_i32 = arith.constant 0 : i32
    %c0_i32_0 = arith.constant 0 : i32
    %c0_i32_1 = arith.constant 0 : i32
    return %c0_i32, %c0_i32_0 : i32, i32
  }
  func.func @transform_5(%arg0: i32) -> (i32, i32) {
    %c0_i32 = arith.constant 0 : i32
    %c0_i32_0 = arith.constant 0 : i32
    return %arg0, %c0_i32 : i32, i32
  }
}

</mosaic_0001>

<llo_original>
// kernel: tpu_custom_call.1
$region0: #{tpu_custom_call.1}
  #allocation0 [shape = 'u32[]', space=smem, size = 0x4, offset = 0x4, fixed_abs, tag = 'smem constant byte address 0x4 - core index']
  #allocation1 [shape = 'u32[144,128]{1,0:T(1,128)}', space=vmem, size = 0x12000, scoped, tag = 'internal scratch']
  %s0 = inlined_call_operand.hbm [shape: bf16[16,32], index: 0, kind: input, shape index: {}]
  %s1 = inlined_call_operand.hbm [shape: bf16[32,128], index: 1, kind: input, shape index: {}]
  %s2 = inlined_call_operand.vmem [shape: f32[1,128], index: 2, kind: input, shape index: {}]
  %s3 = inlined_call_operand.hbm [shape: bf16[128,128], index: 3, kind: input, shape index: {}]
  %s4 = inlined_call_operand.vmem [shape: f32[1,128], index: 4, kind: input, shape index: {}]
  %s5 = inlined_call_operand.hbm [shape: f32[16,128], index: 5, kind: output, shape index: {}]
  %s6 = sld [smem:[#allocation0]]
  $region42: #{tpu_custom_call.1} parent=0
    _
  %s8 = ssub.s32 1, %s6
  %s9 = scalar_select 0, %s8, %s6
  $region1: #{tpu_custom_call.1} parent=0
    #allocation2 [shape = 'u8[4096]{0}', space=vmem, size = 0x1000, scoped, tag = 'input window, operand 0, single buffered']
    #allocation3 [shape = 's32[1]{0}', space=sflag, size = 0x4, scoped, tag = 'scoped memory for tpu_custom_call.1']
    #allocation4 [shape = 's32[1]{0}', space=sflag, size = 0x4, scoped, tag = 'scoped memory for tpu_custom_call.1']
    #allocation5 [shape = 'u8[8192]{0}', space=vmem, size = 0x2000, scoped, tag = 'input window, operand 1, single buffered']
    #allocation6 [shape = 's32[1]{0}', space=sflag, size = 0x4, scoped, tag = 'scoped memory for tpu_custom_call.1']
    #allocation7 [shape = 'u8[32768]{0}', space=vmem, size = 0x8000, scoped, tag = 'input window, operand 3, single buffered']
    #allocation8 [shape = 'u8[8192]{0}', space=vmem, size = 0x2000, scoped, tag = 'output window, operand 0, single buffered']
    %10 = vsyncpa [#allocation3], 0
    %11 = vsyncpa [#allocation6], 0
    %12 = vsyncpa [#allocation4], 0
    // Predicated region
    $region2: #{tpu_custom_call.1} parent=1 // pred_check
      _
    $region3: #{tpu_custom_call.1} parent=1 // pred_check_branch
      %14 = sbr.rel (0) target = $region5
    $region4: #{tpu_custom_call.1} parent=1 // pred_region
      %s16 = ssub.s32 128, 128
      %17 = vsyncadd [#allocation3], %s16
      %s18 = sshll.u32 [#allocation2], 4
      %s19 = int_to_ptr.vmem [resolvable:$true] %s18
      %24 = dma.hbm_to_vmem [thread:$0]  %s0, 128, %s19, [#allocation3], 64, 64, 4
    $region5: #{tpu_custom_call.1} parent=1 // pred_fallthru
      _
    // Predicated region
    $region6: #{tpu_custom_call.1} parent=1 // pred_check
      _
    $region7: #{tpu_custom_call.1} parent=1 // pred_check_branch
      %26 = sbr.rel (0) target = $region9
    $region8: #{tpu_custom_call.1} parent=1 // pred_region
      %s28 = ssub.s32 256, 256
      %29 = vsyncadd [#allocation6], %s28
      %s30 = sshll.u32 [#allocation5], 4
      %s31 = int_to_ptr.vmem [resolvable:$true] %s30
      %36 = dma.hbm_to_vmem [thread:$0]  %s1, 256, %s31, [#allocation6], 64, 64, 4
    $region9: #{tpu_custom_call.1} parent=1 // pred_fallthru
      _
    // Predicated region
    $region10: #{tpu_custom_call.1} parent=1 // pred_check
      _
    $region11: #{tpu_custom_call.1} parent=1 // pred_check_branch
      %38 = sbr.rel (0) target = $region13
    $region12: #{tpu_custom_call.1} parent=1 // pred_region
      _
    $region13: #{tpu_custom_call.1} parent=1 // pred_fallthru
      _
    // Predicated region
    $region14: #{tpu_custom_call.1} parent=1 // pred_check
      _
    $region15: #{tpu_custom_call.1} parent=1 // pred_check_branch
      %40 = sbr.rel (0) target = $region17
    $region16: #{tpu_custom_call.1} parent=1 // pred_region
      %s42 = ssub.s32 1024, 1024
      %43 = vsyncadd [#allocation6], %s42
      %s44 = sshll.u32 [#allocation7], 4
      %s45 = int_to_ptr.vmem [resolvable:$true] %s44
      %50 = dma.hbm_to_vmem [thread:$0]  %s3, 1024, %s45, [#allocation6], 64, 64, 4
    $region17: #{tpu_custom_call.1} parent=1 // pred_fallthru
      _
    // Predicated region
    $region18: #{tpu_custom_call.1} parent=1 // pred_check
      _
    $region19: #{tpu_custom_call.1} parent=1 // pred_check_branch
      %52 = sbr.rel (0) target = $region21
    $region20: #{tpu_custom_call.1} parent=1 // pred_region
      _
    $region21: #{tpu_custom_call.1} parent=1 // pred_fallthru
      _
    // Predicated region
    $region22: #{tpu_custom_call.1} parent=1 // pred_check
      _
    $region23: #{tpu_custom_call.1} parent=1 // pred_check_branch
      %54 = sbr.rel (0) target = $region25
    $region24: #{tpu_custom_call.1} parent=1 // pred_region
      %55 = dma.done [#allocation3], 128
    $region25: #{tpu_custom_call.1} parent=1 // pred_fallthru
      _
    // Predicated region
    $region26: #{tpu_custom_call.1} parent=1 // pred_check
      _
    $region27: #{tpu_custom_call.1} parent=1 // pred_check_branch
      %57 = sbr.rel (0) target = $region29
    $region28: #{tpu_custom_call.1} parent=1 // pred_region
      %58 = dma.done [#allocation6], 256
    $region29: #{tpu_custom_call.1} parent=1 // pred_fallthru
      _
    // Predicated region
    $region30: #{tpu_custom_call.1} parent=1 // pred_check
      _
    $region31: #{tpu_custom_call.1} parent=1 // pred_check_branch
      %60 = sbr.rel (0) target = $region33
    $region32: #{tpu_custom_call.1} parent=1 // pred_region
      %61 = dma.done [#allocation6], 1024
    $region33: #{tpu_custom_call.1} parent=1 // pred_fallthru
      _
    %v63 = vld [vmem:[#allocation2] sm:$0xf]
    %v64 = vld [vmem:[#allocation2 + $0x4] sm:$0xf]
    %v65 = vld [vmem:[#allocation5] sm:$0xf]
    %v66 = vld [vmem:[#allocation5 + $0x4] sm:$0xf]
    %v67 = vld [vmem:[#allocation5 + $0x8] sm:$0xf]
    %v68 = vld [vmem:[#allocation5 + $0xc] sm:$0xf]
    %v69 = vld [vmem:[%s2] sm:$0x1]
    %v71 = vlaneseq
    %v72 = vshrl.u32 %v71, 7
    %v73 = vsub.s32 0, %v72
    %v74 = vrot.slane %v69, %v73
    %v78 = vunpack.c.l.b16 %v63
    %v79 = vunpack.c.l.b16 %v64
    %v80 = vpack.c.b16 %v79, %v78
    %v85 = vunpack.c.l.b16 %v65
    %v86 = vunpack.c.l.b16 %v66
    %v87 = vunpack.c.l.b16 %v67
    %v88 = vunpack.c.l.b16 %v68
    %v89 = vpack.c.b16 %v86, %v85
    %v90 = vpack.c.b16 %v88, %v87
    %vm93 = vcmask 261120
    %v95 = vsel %vm93, %v80, 0
    %97 = vmatprep.subr.bf16.mxu0 0
    %98 = vmatpush1.bf16.msra.mxu0 %v89
    %99 = vmatprep.subr.bf16.mxu0 0
    %100 = vmatpush1.bf16.msra.mxu0 %v90
    %101 = vmatprep.subr.bf16.mxu0 0
    %102 = vmatpush1.bf16.msra.mxu0 0
    %103 = vmatprep.subr.bf16.mxu0 0
    %104 = vmatpush1.bf16.msra.mxu0 0
    %105 = vmatprep.subr.bf16.mxu0 0
    %106 = vmatpush1.bf16.msra.mxu0 0
    %107 = vmatprep.subr.bf16.mxu0 0
    %108 = vmatpush1.bf16.msra.mxu0 0
    %109 = vmatprep.subr.bf16.mxu0 0
    %110 = vmatpush1.bf16.msra.mxu0 0
    %111 = vmatprep.subr.bf16.mxu0 0
    %112 = vmatpush1.bf16.msra.mxu0 0
    %113 = vmatprep.subr.bf16.mxu0 0
    %114 = vmatpush1.bf16.msra.mxu0 0
    %115 = vmatprep.subr.bf16.mxu0 0
    %116 = vmatpush1.bf16.msra.mxu0 0
    %117 = vmatprep.subr.bf16.mxu0 0
    %118 = vmatpush1.bf16.msra.mxu0 0
    %119 = vmatprep.subr.bf16.mxu0 0
    %120 = vmatpush1.bf16.msra.mxu0 0
    %121 = vmatprep.subr.bf16.mxu0 0
    %122 = vmatpush1.bf16.msra.mxu0 0
    %123 = vmatprep.subr.bf16.mxu0 0
    %124 = vmatpush1.bf16.msra.mxu0 0
    %125 = vmatprep.subr.bf16.mxu0 0
    %126 = vmatpush1.bf16.msra.mxu0 0
    %127 = vmatprep.subr.bf16.mxu0 0
    %128 = vmatpush1.bf16.msra.mxu0 0
    %129 = vmatprep.mubr.bf16.mxu0 0
    %130 = vmatmul.mubr.bf16.gmra.mrb[0].mxu0 %v95
    %v131 = vpop.f32.mrb[0].mxu0
    %v132 = vadd.f32 %v74, %v131
    %v133 = vpop.f32.mrb[0].mxu0
    %v134 = vpop.f32.mrb[0].mxu0
    %v135 = vadd.f32 %v74, %v134
    %v136 = vpop.f32.mrb[0].mxu0
    %137 = vdwg.mxu0
    %vm138 = vcmp.gt.f32.partialorder %v132, 0.0
    %vm139 = vcmp.gt.f32.partialorder %v135, 0.0
    %v140 = vmul.f32 %v132, 0.01
    %v141 = vmul.f32 %v135, 0.01
    %v142 = vsel %vm138, %v132, %v140
    %v143 = vsel %vm139, %v135, %v141
    %v144 = vpack.c.bf16 %v143, %v142
    %v145 = vld [vmem:[#allocation7] sm:$0xf]
    %v146 = vld [vmem:[#allocation7 + $0x4] sm:$0xf]
    %v147 = vld [vmem:[#allocation7 + $0x8] sm:$0xf]
    %v148 = vld [vmem:[#allocation7 + $0xc] sm:$0xf]
    %v149 = vld [vmem:[#allocation7 + $0x10] sm:$0xf]
    %v150 = vld [vmem:[#allocation7 + $0x14] sm:$0xf]
    %v151 = vld [vmem:[#allocation7 + $0x18] sm:$0xf]
    %v152 = vld [vmem:[#allocation7 + $0x1c] sm:$0xf]
    %v153 = vld [vmem:[#allocation7 + $0x20] sm:$0xf]
    %v154 = vld [vmem:[#allocation7 + $0x24] sm:$0xf]
    %v155 = vld [vmem:[#allocation7 + $0x28] sm:$0xf]
    %v156 = vld [vmem:[#allocation7 + $0x2c] sm:$0xf]
    %v157 = vld [vmem:[#allocation7 + $0x30] sm:$0xf]
    %v158 = vld [vmem:[#allocation7 + $0x34] sm:$0xf]
    %v159 = vld [vmem:[#allocation7 + $0x38] sm:$0xf]
    %v160 = vld [vmem:[#allocation7 + $0x3c] sm:$0xf]
    %v161 = vld [vmem:[%s4] sm:$0x1]
    %v163 = vlaneseq
    %v164 = vshrl.u32 %v163, 7
    %v165 = vsub.s32 0, %v164
    %v166 = vrot.slane %v161, %v165
    %v184 = vunpack.c.l.b16 %v145
    %v185 = vunpack.c.l.b16 %v146
    %v186 = vunpack.c.l.b16 %v147
    %v187 = vunpack.c.l.b16 %v148
    %v188 = vunpack.c.l.b16 %v149
    %v189 = vunpack.c.l.b16 %v150
    %v190 = vunpack.c.l.b16 %v151
    %v191 = vunpack.c.l.b16 %v152
    %v192 = vunpack.c.l.b16 %v153
    %v193 = vunpack.c.l.b16 %v154
    %v194 = vunpack.c.l.b16 %v155
    %v195 = vunpack.c.l.b16 %v156
    %v196 = vunpack.c.l.b16 %v157
    %v197 = vunpack.c.l.b16 %v158
    %v198 = vunpack.c.l.b16 %v159
    %v199 = vunpack.c.l.b16 %v160
    %v200 = vpack.c.b16 %v185, %v184
    %v201 = vpack.c.b16 %v187, %v186
    %v202 = vpack.c.b16 %v189, %v188
    %v203 = vpack.c.b16 %v191, %v190
    %v204 = vpack.c.b16 %v193, %v192
    %v205 = vpack.c.b16 %v195, %v194
    %v206 = vpack.c.b16 %v197, %v196
    %v207 = vpack.c.b16 %v199, %v198
    %216 = vmatprep.subr.bf16.mxu0 0
    %217 = vmatpush1.bf16.msra.mxu0 %v200
    %218 = vmatprep.subr.bf16.mxu0 0
    %219 = vmatpush1.bf16.msra.mxu0 %v201
    %220 = vmatprep.subr.bf16.mxu0 0
    %221 = vmatpush1.bf16.msra.mxu0 %v202
    %222 = vmatprep.subr.bf16.mxu0 0
    %223 = vmatpush1.bf16.msra.mxu0 %v203
    %224 = vmatprep.subr.bf16.mxu0 0
    %225 = vmatpush1.bf16.msra.mxu0 %v204
    %226 = vmatprep.subr.bf16.mxu0 0
    %227 = vmatpush1.bf16.msra.mxu0 %v205
    %228 = vmatprep.subr.bf16.mxu0 0
    %229 = vmatpush1.bf16.msra.mxu0 %v206
    %230 = vmatprep.subr.bf16.mxu0 0
    %231 = vmatpush1.bf16.msra.mxu0 %v207
    %232 = vmatprep.subr.bf16.mxu0 0
    %233 = vmatpush1.bf16.msra.mxu0 0
    %234 = vmatprep.subr.bf16.mxu0 0
    %235 = vmatpush1.bf16.msra.mxu0 0
    %236 = vmatprep.subr.bf16.mxu0 0
    %237 = vmatpush1.bf16.msra.mxu0 0
    %238 = vmatprep.subr.bf16.mxu0 0
    %239 = vmatpush1.bf16.msra.mxu0 0
    %240 = vmatprep.subr.bf16.mxu0 0
    %241 = vmatpush1.bf16.msra.mxu0 0
    %242 = vmatprep.subr.bf16.mxu0 0
    %243 = vmatpush1.bf16.msra.mxu0 0
    %244 = vmatprep.subr.bf16.mxu0 0
    %245 = vmatpush1.bf16.msra.mxu0 0
    %246 = vmatprep.subr.bf16.mxu0 0
    %247 = vmatpush1.bf16.msra.mxu0 0
    %248 = vmatprep.mubr.bf16.mxu0 0
    %249 = vmatmul.mubr.bf16.gmra.mrb[0].mxu0 %v144
    %v250 = vpop.f32.mrb[0].mxu0
    %v251 = vadd.f32 %v166, %v250
    %v252 = vpop.f32.mrb[0].mxu0
    %v253 = vpop.f32.mrb[0].mxu0
    %v254 = vadd.f32 %v166, %v253
    %v255 = vpop.f32.mrb[0].mxu0
    %256 = vdwg.mxu0
    %vm257 = vcmp.gt.f32.partialorder %v251, 0.0
    %vm258 = vcmp.gt.f32.partialorder %v254, 0.0
    %v259 = vmul.f32 %v251, 0.01
    %v260 = vmul.f32 %v254, 0.01
    %v261 = vsel %vm257, %v251, %v259
    %v262 = vsel %vm258, %v254, %v260
    %263 = vst [vmem:[#allocation8] sm:$0xff] %v261
    %264 = vst [vmem:[#allocation8 + $0x8] sm:$0xff] %v262
    // Predicated region
    $region34: #{tpu_custom_call.1} parent=1 // pred_check
      _
    $region35: #{tpu_custom_call.1} parent=1 // pred_check_branch
      %266 = sbr.rel (0) target = $region37
    $region36: #{tpu_custom_call.1} parent=1 // pred_region
      %s268 = ssub.s32 256, 256
      %269 = vsyncadd [#allocation4], %s268
      %s270 = sshll.u32 [#allocation8], 4
      %s271 = int_to_ptr.vmem [resolvable:$true] %s270
      %276 = dma.vmem_to_hbm [thread:$0]  %s271, 256, %s5, [#allocation4], 128, 128, 8
    $region37: #{tpu_custom_call.1} parent=1 // pred_fallthru
      _
    // Predicated region
    $region38: #{tpu_custom_call.1} parent=1 // pred_check
      _
    $region39: #{tpu_custom_call.1} parent=1 // pred_check_branch
      %278 = sbr.rel (0) target = $region41
    $region40: #{tpu_custom_call.1} parent=1 // pred_region
      %279 = dma.done [#allocation4], 256
    $region41: #{tpu_custom_call.1} parent=1 // pred_fallthru
      _
    %280 = vsyncpa [#allocation3], 1
    %281 = vsyncpa [#allocation6], 1
    %282 = vsyncpa [#allocation4], 1

</llo_original>
